<compile_context>
chip_gen: v7x
topology: tpu7x:2x2x1
jax: 0.10.0
libtpu: 0.0.40
codegen_flags: <defaults>
</compile_context>

<pallas_src>
import functools

import jax
import jax.numpy as jnp
from jax.experimental import pallas as pl
from jax.experimental.pallas import tpu as pltpu


# ---------- dot helpers (keep transposes inside dot_general, f32 accumulation) ----------
def _dot_nt(a, b):  # a @ b.T
    return jax.lax.dot_general(a, b, (((1,), (1,)), ((), ())),
                               preferred_element_type=jnp.float32)


def _dot_tn(a, b):  # a.T @ b
    return jax.lax.dot_general(a, b, (((0,), (0,)), ((), ())),
                               preferred_element_type=jnp.float32)


# ============================ fused k-means kernel ============================
def _kmeans_fused_kernel(x_ref, proto_ref, idx_ref, xn_ref, var_sm,
                         *, n_cluster, max_iter, tol):
    N, D = x_ref.shape
    K = n_cluster
    inv_kd = jnp.float32(1.0 / (K * D))

    # ---- one-time setup (loop invariants) ----
    x = x_ref[...]
    # F.normalize(x, p=2, dim=-1, eps=1e-12)  ==  x * rsqrt(max(||x||^2, 1e-24))
    xn_ref[...] = x * jax.lax.rsqrt(
        jnp.maximum(jnp.sum(x * x, axis=-1, keepdims=True), 1e-24))
    proto_ref[...] = x[:K, :]                       # prototypes = x[:n_cluster]
    idx_ref[...] = jnp.zeros((N, 1), jnp.int32)
    var_sm[0] = jnp.float32(jnp.inf)                # not-yet-converged sentinel

    # ---- k-means iterations, fully in-kernel ----
    @pl.loop(0, max_iter)
    def _(_it):
        @pl.when(var_sm[0] >= tol)                  # early-break as a converged guard
        def _():
            p = proto_ref[...]
            pn = p * jax.lax.rsqrt(
                jnp.maximum(jnp.sum(p * p, axis=-1, keepdims=True), 1e-24))

            # cosine similarity on the MXU, f32 accumulation
            sim = _dot_nt(xn_ref[...], pn)                          # (N, K)

            # torch .max(dim=-1): value max + FIRST max index
            col = jax.lax.broadcasted_iota(jnp.int32, (N, K), 1)
            mx = jnp.max(sim, axis=1, keepdims=True)                # (N, 1)
            idx = jnp.min(jnp.where(sim == mx, col, K),
                          axis=1, keepdims=True)                    # (N, 1)

            # update_center: fold (counts + 1e-6)^-1 into the one-hot weights so a
            # single (K, D) matmul yields the new prototypes (no (K,1) MXU output).
            onehot = (col == idx).astype(jnp.float32)               # (N, K)
            counts = jnp.sum(onehot, axis=0, keepdims=True)         # (1, K) sublane reduce
            w = onehot * pl.reciprocal(counts + 1e-6, approx=False) # EUP reciprocal
            pnew = _dot_tn(w, x_ref[...])                           # (K, D)

            diff = pnew - p
            var_sm[0] = jnp.sum(diff * diff) * inv_kd               # mean squared change
            proto_ref[...] = pnew
            idx_ref[...] = idx


# ================================ forward pass ================================
@functools.partial(jax.jit, static_argnames=("n_clusters", "max_iter", "tol"))
def kmeans_unitspace_v2_forward(x, n_clusters=20, max_iter=200, tol=1e-5):
    """x: (N, 640) float.  Returns (prototypes (n_clusters, 640), nearest_idx[0])."""
    x = x.astype(jnp.float32)
    N, D = x.shape
    K = n_clusters
    assert N >= K, "need at least n_clusters samples (prototypes = x[:n_clusters])"

    kern = functools.partial(_kmeans_fused_kernel,
                             n_cluster=K, max_iter=max_iter, tol=tol)
    prototypes, idx = pl.pallas_call(
        kern,
        out_shape=(jax.ShapeDtypeStruct((K, D), jnp.float32),
                   jax.ShapeDtypeStruct((N, 1), jnp.int32)),
        in_specs=[pl.BlockSpec(memory_space=pltpu.MemorySpace.VMEM)],
        out_specs=(pl.BlockSpec(memory_space=pltpu.MemorySpace.VMEM),
                   pl.BlockSpec(memory_space=pltpu.MemorySpace.VMEM)),
        scratch_shapes=[pltpu.VMEM((N, D), jnp.float32),   # pre-normalized x (resident)
                        pltpu.SMEM((1,), jnp.float32)],    # variation / convergence flag
        compiler_params=pltpu.CompilerParams(vmem_limit_bytes=32 * 1024 * 1024),
    )(x)

    # PyTorch forward returns (prototypes, nearst_idx[0])
    return prototypes, idx[0, 0]


if __name__ == "__main__":
    key = jax.random.PRNGKey(0)

    # D = 640 is fixed by the module (nn.BatchNorm1d(640)); small token count N = 32.
    N, D = 32, 640
    x = jax.random.normal(key, (N, D), jnp.float32)

    prototypes, idx0 = kmeans_unitspace_v2_forward(
        x, n_clusters=20, max_iter=200, tol=1e-5)

    jax.block_until_ready((prototypes, idx0))
    print("KERNEL_OK")
</pallas_src>

<mosaic_0001>
module attributes {stable_mosaic.version = 11 : i64} {
  func.func @_kmeans_fused_kernel(%arg0: memref<32x640xf32, #tpu.memory_space<vmem>>, %arg1: memref<20x640xf32, #tpu.memory_space<vmem>>, %arg2: memref<32x1xi32, #tpu.memory_space<vmem>>, %arg3: memref<32x640xf32, #tpu.memory_space<vmem>>, %arg4: memref<1xf32, #tpu.memory_space<smem>>) attributes {dimension_semantics = [], scalar_prefetch = 0 : i64, scratch_operands = 2 : i64, tpu.core_type = #tpu.core_type<tc>} {
    %c0 = arith.constant 0 : index
    %c0_0 = arith.constant 0 : index
    %0 = vector.load %arg0[%c0, %c0_0] : memref<32x640xf32, #tpu.memory_space<vmem>>, vector<32x640xf32>
    %1 = arith.mulf %0, %0 : vector<32x640xf32>
    %cst = arith.constant dense<0.000000e+00> : vector<32xf32>
    %2 = vector.multi_reduction <add>, %1, %cst [1] : vector<32x640xf32> to vector<32xf32>
    %3 = vector.shape_cast %2 : vector<32xf32> to vector<32x1xf32>
    %cst_1 = arith.constant 1.000000e-24 : f32
    %4 = vector.broadcast %cst_1 : f32 to vector<32x1xf32>
    %5 = arith.maximumf %3, %4 : vector<32x1xf32>
    %6 = math.rsqrt %5 : vector<32x1xf32>
    %7 = vector.broadcast %6 : vector<32x1xf32> to vector<32x640xf32>
    %8 = arith.mulf %0, %7 : vector<32x640xf32>
    %c0_2 = arith.constant 0 : index
    %c0_3 = arith.constant 0 : index
    %9 = vector.load %arg3[%c0_2, %c0_3] : memref<32x640xf32, #tpu.memory_space<vmem>>, vector<32x640xf32>
    tpu.vector_store %arg3[%c0_2, %c0_3], %8 {strides = array<i32>} : memref<32x640xf32, #tpu.memory_space<vmem>>, vector<32x640xf32>,
    %10 = vector.extract_strided_slice %0 {offsets = [0, 0], sizes = [20, 640], strides = [1, 1]} : vector<32x640xf32> to vector<20x640xf32>
    %c0_4 = arith.constant 0 : index
    %c0_5 = arith.constant 0 : index
    %11 = vector.load %arg1[%c0_4, %c0_5] : memref<20x640xf32, #tpu.memory_space<vmem>>, vector<20x640xf32>
    tpu.vector_store %arg1[%c0_4, %c0_5], %10 {strides = array<i32>} : memref<20x640xf32, #tpu.memory_space<vmem>>, vector<20x640xf32>,
    %c0_i32 = arith.constant 0 : i32
    %12 = vector.broadcast %c0_i32 : i32 to vector<32x1xi32>
    %c0_6 = arith.constant 0 : index
    %c0_7 = arith.constant 0 : index
    %13 = vector.load %arg2[%c0_6, %c0_7] : memref<32x1xi32, #tpu.memory_space<vmem>>, vector<32x1xi32>
    tpu.vector_store %arg2[%c0_6, %c0_7], %12 {strides = array<i32>} : memref<32x1xi32, #tpu.memory_space<vmem>>, vector<32x1xi32>,
    %cst_8 = arith.constant 0x7F800000 : f32
    %c0_9 = arith.constant 0 : index
    %14 = memref.load %arg4[%c0_9] : memref<1xf32, #tpu.memory_space<smem>>
    memref.store %cst_8, %arg4[%c0_9] : memref<1xf32, #tpu.memory_space<smem>>
    %cst_10 = arith.constant 7.812500e-05 : f32
    %c0_i32_11 = arith.constant 0 : i32
    %c200_i32 = arith.constant 200 : i32
    %15 = arith.addi %c0_i32_11, %c200_i32 : i32
    %c1_i32 = arith.constant 1 : i32
    scf.for %arg5 = %c0_i32_11 to %15 step %c1_i32  : i32 {
      %c0_12 = arith.constant 0 : index
      %16 = memref.load %arg4[%c0_12] : memref<1xf32, #tpu.memory_space<smem>>
      %cst_13 = arith.constant 9.99999974E-6 : f32
      %17 = arith.cmpf oge, %16, %cst_13 : f32
      %18 = arith.extui %17 : i1 to i32
      %c0_i32_14 = arith.constant 0 : i32
      %19 = arith.cmpi ne, %18, %c0_i32_14 : i32
      scf.if %19 {
        %c0_15 = arith.constant 0 : index
        %c0_16 = arith.constant 0 : index
        %20 = vector.load %arg1[%c0_15, %c0_16] : memref<20x640xf32, #tpu.memory_space<vmem>>, vector<20x640xf32>
        %21 = arith.mulf %20, %20 : vector<20x640xf32>
        %cst_17 = arith.constant dense<0.000000e+00> : vector<20xf32>
        %22 = vector.multi_reduction <add>, %21, %cst_17 [1] : vector<20x640xf32> to vector<20xf32>
        %23 = vector.shape_cast %22 : vector<20xf32> to vector<20x1xf32>
        %cst_18 = arith.constant 1.000000e-24 : f32
        %24 = vector.broadcast %cst_18 : f32 to vector<20x1xf32>
        %25 = arith.maximumf %23, %24 : vector<20x1xf32>
        %26 = math.rsqrt %25 : vector<20x1xf32>
        %27 = vector.broadcast %26 : vector<20x1xf32> to vector<20x640xf32>
        %28 = arith.mulf %20, %27 : vector<20x640xf32>
        %c0_19 = arith.constant 0 : index
        %c0_20 = arith.constant 0 : index
        %29 = vector.load %arg3[%c0_19, %c0_20] : memref<32x640xf32, #tpu.memory_space<vmem>>, vector<32x640xf32>
        %cst_21 = arith.constant dense<0.000000e+00> : vector<32x20xf32>
        %30 = tpu.matmul %29, %28, %cst_21 {dimension_numbers = #tpu.dot_dimension_numbers<[1], [1], [0], [0], [0, 0, 1, 0], [], []>} : vector<32x640xf32>, vector<20x640xf32>, vector<32x20xf32> -> vector<32x20xf32>
        %31 = tpu.iota {dimensions = array<i32: 1>} : vector<32x20xi32>
        %cst_22 = arith.constant dense<0xFF800000> : vector<32xf32>
        %32 = vector.multi_reduction <maximumf>, %30, %cst_22 [1] : vector<32x20xf32> to vector<32xf32>
        %33 = vector.shape_cast %32 : vector<32xf32> to vector<32x1xf32>
        %34 = vector.broadcast %33 : vector<32x1xf32> to vector<32x20xf32>
        %35 = arith.cmpf oeq, %30, %34 : vector<32x20xf32>
        %c20_i32 = arith.constant 20 : i32
        %36 = vector.broadcast %c20_i32 : i32 to vector<32x20xi32>
        %37 = arith.select %35, %31, %36 : vector<32x20xi1>, vector<32x20xi32>
        %cst_23 = arith.constant dense<2147483647> : vector<32xi32>
        %38 = vector.multi_reduction <minsi>, %37, %cst_23 [1] : vector<32x20xi32> to vector<32xi32>
        %39 = vector.shape_cast %38 : vector<32xi32> to vector<32x1xi32>
        %40 = vector.broadcast %39 : vector<32x1xi32> to vector<32x20xi32>
        %41 = arith.cmpi eq, %31, %40 : vector<32x20xi32>
        %42 = arith.extui %41 : vector<32x20xi1> to vector<32x20xi32>
        %43 = arith.sitofp %42 : vector<32x20xi32> to vector<32x20xf32>
        %cst_24 = arith.constant dense<0.000000e+00> : vector<20xf32>
        %44 = vector.multi_reduction <add>, %43, %cst_24 [0] : vector<32x20xf32> to vector<20xf32>
        %45 = vector.shape_cast %44 : vector<20xf32> to vector<1x20xf32>
        %cst_25 = arith.constant 9.99999997E-7 : f32
        %46 = vector.broadcast %cst_25 : f32 to vector<1x20xf32>
        %47 = arith.addf %45, %46 : vector<1x20xf32>
        %48 = tpu.reciprocal %47 : vector<1x20xf32> -> vector<1x20xf32>
        %49 = vector.broadcast %48 : vector<1x20xf32> to vector<32x20xf32>
        %50 = arith.mulf %43, %49 : vector<32x20xf32>
        %c0_26 = arith.constant 0 : index
        %c0_27 = arith.constant 0 : index
        %51 = vector.load %arg0[%c0_26, %c0_27] : memref<32x640xf32, #tpu.memory_space<vmem>>, vector<32x640xf32>
        %cst_28 = arith.constant dense<0.000000e+00> : vector<20x640xf32>
        %52 = tpu.matmul %50, %51, %cst_28 {dimension_numbers = #tpu.dot_dimension_numbers<[0], [0], [1], [1], [0, 1, 1, 1], [], []>} : vector<32x20xf32>, vector<32x640xf32>, vector<20x640xf32> -> vector<20x640xf32>
        %53 = arith.subf %52, %20 : vector<20x640xf32>
        %54 = arith.mulf %53, %53 : vector<20x640xf32>
        %55 = vector.shape_cast %54 : vector<20x640xf32> to vector<1x20x640xf32>
        %cst_29 = arith.constant dense<0.000000e+00> : vector<1xf32>
        %56 = vector.multi_reduction <add>, %55, %cst_29 [1, 2] : vector<1x20x640xf32> to vector<1xf32>
        %57 = vector.shape_cast %56 : vector<1xf32> to vector<1x1x1xf32>
        %58 = vector.extract %57[0, 0, 0] : f32 from vector<1x1x1xf32>
        %59 = arith.mulf %58, %cst_10 : f32
        %c0_30 = arith.constant 0 : index
        %60 = memref.load %arg4[%c0_30] : memref<1xf32, #tpu.memory_space<smem>>
        memref.store %59, %arg4[%c0_30] : memref<1xf32, #tpu.memory_space<smem>>
        %c0_31 = arith.constant 0 : index
        %c0_32 = arith.constant 0 : index
        %61 = vector.load %arg1[%c0_31, %c0_32] : memref<20x640xf32, #tpu.memory_space<vmem>>, vector<20x640xf32>
        tpu.vector_store %arg1[%c0_31, %c0_32], %52 {strides = array<i32>} : memref<20x640xf32, #tpu.memory_space<vmem>>, vector<20x640xf32>,
        %c0_33 = arith.constant 0 : index
        %c0_34 = arith.constant 0 : index
        %62 = vector.load %arg2[%c0_33, %c0_34] : memref<32x1xi32, #tpu.memory_space<vmem>>, vector<32x1xi32>
        tpu.vector_store %arg2[%c0_33, %c0_34], %39 {strides = array<i32>} : memref<32x1xi32, #tpu.memory_space<vmem>>, vector<32x1xi32>,
      } else {
      }
    }
    return
  }
}

</mosaic_0001>

<llo_original>
// kernel: kmeans_unitspace_v2_forward.1
$region0: #{kmeans_unitspace_v2_forward.1}
  #allocation0 [shape = 'u32[]', space=smem, size = 0x4, offset = 0x4, fixed_abs, tag = 'smem constant byte address 0x4 - core index']
  #allocation1 [shape = 'u32[144,128]{1,0:T(1,128)}', space=vmem, size = 0x12000, scoped, tag = 'internal scratch']
  #allocation2 [shape = 'f32[32,640]{1,0:T(8,128)}', space=vmem, size = 0x14000, scoped, tag = 'scratch operand']
  #allocation3 [shape = 'f32[1]{0:T(128)}', space=smem, size = 0x200, scoped, tag = 'scratch operand']
  %s0 = inlined_call_operand.hbm [shape: f32[32,640], index: 0, kind: input, shape index: {}]
  %s1 = inlined_call_operand.hbm [shape: f32[20,640], index: 1, kind: output, shape index: {0}]
  %s2 = inlined_call_operand.vmem [shape: s32[32,1], index: 2, kind: output, shape index: {1}]
  %3 = xla_tuple %s1, %s2
  %s4 = sld [smem:[#allocation0]]
  $region37: #{kmeans_unitspace_v2_forward.1} parent=0
    _
  %s6 = ssub.s32 1, %s4
  %s7 = scalar_select 0, %s6, %s4
  $region1: #{kmeans_unitspace_v2_forward.1} parent=0
    #allocation4 [shape = 'u8[81920]{0}', space=vmem, size = 0x14000, scoped, tag = 'input window, operand 0, single buffered']
    #allocation5 [shape = 's32[1]{0}', space=sflag, size = 0x4, scoped, tag = 'scoped memory for kmeans_unitspace_v2_forward.1']
    #allocation6 [shape = 's32[1]{0}', space=sflag, size = 0x4, scoped, tag = 'scoped memory for kmeans_unitspace_v2_forward.1']
    #allocation7 [shape = 'u8[61440]{0}', space=vmem, size = 0xf000, scoped, tag = 'output window, operand 0, single buffered']
    %8 = vsyncpa [#allocation5], 0
    %9 = vsyncpa [#allocation6], 0
    // Predicated region
    $region2: #{kmeans_unitspace_v2_forward.1} parent=1 // pred_check
      _
    $region3: #{kmeans_unitspace_v2_forward.1} parent=1 // pred_check_branch
      %11 = sbr.rel (0) target = $region5
    $region4: #{kmeans_unitspace_v2_forward.1} parent=1 // pred_region
      %s13 = ssub.s32 2560, 2560
      %14 = vsyncadd [#allocation5], %s13
      %s15 = sshll.u32 [#allocation4], 4
      %s16 = int_to_ptr.vmem [resolvable:$true] %s15
      %21 = dma.hbm_to_vmem [thread:$0]  %s0, 2560, %s16, [#allocation5], 640, 640, 40
    $region5: #{kmeans_unitspace_v2_forward.1} parent=1 // pred_fallthru
      _
    // Predicated region
    $region6: #{kmeans_unitspace_v2_forward.1} parent=1 // pred_check
      _
    $region7: #{kmeans_unitspace_v2_forward.1} parent=1 // pred_check_branch
      %23 = sbr.rel (0) target = $region9
    $region8: #{kmeans_unitspace_v2_forward.1} parent=1 // pred_region
      %24 = dma.done [#allocation5], 2560
    $region9: #{kmeans_unitspace_v2_forward.1} parent=1 // pred_fallthru
      _
    %v25 = vld [vmem:[#allocation4] sm:$0xff]
    %v26 = vld [vmem:[#allocation4 + $0x8] sm:$0xff]
    %v27 = vld [vmem:[#allocation4 + $0x10] sm:$0xff]
    %v28 = vld [vmem:[#allocation4 + $0x18] sm:$0xff]
    %v29 = vld [vmem:[#allocation4 + $0x20] sm:$0xff]
    %v30 = vld [vmem:[#allocation4 + $0x28] sm:$0xff]
    %v31 = vld [vmem:[#allocation4 + $0x30] sm:$0xff]
    %v32 = vld [vmem:[#allocation4 + $0x38] sm:$0xff]
    %v33 = vld [vmem:[#allocation4 + $0x40] sm:$0xff]
    %v34 = vld [vmem:[#allocation4 + $0x48] sm:$0xff]
    %v35 = vld [vmem:[#allocation4 + $0x50] sm:$0xff]
    %v36 = vld [vmem:[#allocation4 + $0x58] sm:$0xff]
    %v37 = vld [vmem:[#allocation4 + $0x60] sm:$0xff]
    %v38 = vld [vmem:[#allocation4 + $0x68] sm:$0xff]
    %v39 = vld [vmem:[#allocation4 + $0x70] sm:$0xff]
    %v40 = vld [vmem:[#allocation4 + $0x78] sm:$0xff]
    %v41 = vld [vmem:[#allocation4 + $0x80] sm:$0xff]
    %v42 = vld [vmem:[#allocation4 + $0x88] sm:$0xff]
    %v43 = vld [vmem:[#allocation4 + $0x90] sm:$0xff]
    %v44 = vld [vmem:[#allocation4 + $0x98] sm:$0xff]
    %v45 = vmul.f32 %v25, %v25
    %v46 = vmul.f32 %v26, %v26
    %v47 = vmul.f32 %v27, %v27
    %v48 = vmul.f32 %v28, %v28
    %v49 = vmul.f32 %v29, %v29
    %v50 = vmul.f32 %v30, %v30
    %v51 = vmul.f32 %v31, %v31
    %v52 = vmul.f32 %v32, %v32
    %v53 = vmul.f32 %v33, %v33
    %v54 = vmul.f32 %v34, %v34
    %v55 = vmul.f32 %v35, %v35
    %v56 = vmul.f32 %v36, %v36
    %v57 = vmul.f32 %v37, %v37
    %v58 = vmul.f32 %v38, %v38
    %v59 = vmul.f32 %v39, %v39
    %v60 = vmul.f32 %v40, %v40
    %v61 = vmul.f32 %v41, %v41
    %v62 = vmul.f32 %v42, %v42
    %v63 = vmul.f32 %v43, %v43
    %v64 = vmul.f32 %v44, %v44
    %v65 = vadd.f32 %v45, %v46
    %v66 = vadd.f32 %v65, %v47
    %v67 = vadd.f32 %v66, %v48
    %v68 = vadd.f32 %v67, %v49
    %69 = vadd.xlane.f32.xlu0 %v68
    %v70 = vpop.xlane.xlu0 %69
    %v71 = vadd.f32 %v50, %v51
    %v72 = vadd.f32 %v71, %v52
    %v73 = vadd.f32 %v72, %v53
    %v74 = vadd.f32 %v73, %v54
    %75 = vadd.xlane.f32.xlu0 %v74
    %v76 = vpop.xlane.xlu0 %75
    %v77 = vadd.f32 %v55, %v56
    %v78 = vadd.f32 %v77, %v57
    %v79 = vadd.f32 %v78, %v58
    %v80 = vadd.f32 %v79, %v59
    %81 = vadd.xlane.f32.xlu0 %v80
    %v82 = vpop.xlane.xlu0 %81
    %v83 = vadd.f32 %v60, %v61
    %v84 = vadd.f32 %v83, %v62
    %v85 = vadd.f32 %v84, %v63
    %v86 = vadd.f32 %v85, %v64
    %87 = vadd.xlane.f32.xlu0 %v86
    %v88 = vpop.xlane.xlu0 %87
    %v89 = vmax.f32 %v70, 1e-24
    %v90 = vmax.f32 %v76, 1e-24
    %v91 = vmax.f32 %v82, 1e-24
    %v92 = vmax.f32 %v88, 1e-24
    %v93 = vrsqrt.pop %v89
    %v94 = vrsqrt.pop %v90
    %v95 = vrsqrt.pop %v91
    %v96 = vrsqrt.pop %v92
    %v97 = vmul.f32 %v25, %v93
    %v98 = vmul.f32 %v26, %v93
    %v99 = vmul.f32 %v27, %v93
    %v100 = vmul.f32 %v28, %v93
    %v101 = vmul.f32 %v29, %v93
    %v102 = vmul.f32 %v30, %v94
    %v103 = vmul.f32 %v31, %v94
    %v104 = vmul.f32 %v32, %v94
    %v105 = vmul.f32 %v33, %v94
    %v106 = vmul.f32 %v34, %v94
    %v107 = vmul.f32 %v35, %v95
    %v108 = vmul.f32 %v36, %v95
    %v109 = vmul.f32 %v37, %v95
    %v110 = vmul.f32 %v38, %v95
    %v111 = vmul.f32 %v39, %v95
    %v112 = vmul.f32 %v40, %v96
    %v113 = vmul.f32 %v41, %v96
    %v114 = vmul.f32 %v42, %v96
    %v115 = vmul.f32 %v43, %v96
    %v116 = vmul.f32 %v44, %v96
    %117 = vst [vmem:[#allocation2] sm:$0xff] %v97
    %118 = vst [vmem:[#allocation2 + $0x8] sm:$0xff] %v98
    %119 = vst [vmem:[#allocation2 + $0x10] sm:$0xff] %v99
    %120 = vst [vmem:[#allocation2 + $0x18] sm:$0xff] %v100
    %121 = vst [vmem:[#allocation2 + $0x20] sm:$0xff] %v101
    %122 = vst [vmem:[#allocation2 + $0x28] sm:$0xff] %v102
    %123 = vst [vmem:[#allocation2 + $0x30] sm:$0xff] %v103
    %124 = vst [vmem:[#allocation2 + $0x38] sm:$0xff] %v104
    %125 = vst [vmem:[#allocation2 + $0x40] sm:$0xff] %v105
    %126 = vst [vmem:[#allocation2 + $0x48] sm:$0xff] %v106
    %127 = vst [vmem:[#allocation2 + $0x50] sm:$0xff] %v107
    %128 = vst [vmem:[#allocation2 + $0x58] sm:$0xff] %v108
    %129 = vst [vmem:[#allocation2 + $0x60] sm:$0xff] %v109
    %130 = vst [vmem:[#allocation2 + $0x68] sm:$0xff] %v110
    %131 = vst [vmem:[#allocation2 + $0x70] sm:$0xff] %v111
    %132 = vst [vmem:[#allocation2 + $0x78] sm:$0xff] %v112
    %133 = vst [vmem:[#allocation2 + $0x80] sm:$0xff] %v113
    %134 = vst [vmem:[#allocation2 + $0x88] sm:$0xff] %v114
    %135 = vst [vmem:[#allocation2 + $0x90] sm:$0xff] %v115
    %136 = vst [vmem:[#allocation2 + $0x98] sm:$0xff] %v116
    %137 = vst [vmem:[#allocation7] sm:$0xff] %v25
    %138 = vst [vmem:[#allocation7 + $0x8] sm:$0xff] %v26
    %139 = vst [vmem:[#allocation7 + $0x10] sm:$0xff] %v27
    %140 = vst [vmem:[#allocation7 + $0x18] sm:$0xff] %v28
    %141 = vst [vmem:[#allocation7 + $0x20] sm:$0xff] %v29
    %142 = vst [vmem:[#allocation7 + $0x28] sm:$0xff] %v30
    %143 = vst [vmem:[#allocation7 + $0x30] sm:$0xff] %v31
    %144 = vst [vmem:[#allocation7 + $0x38] sm:$0xff] %v32
    %145 = vst [vmem:[#allocation7 + $0x40] sm:$0xff] %v33
    %146 = vst [vmem:[#allocation7 + $0x48] sm:$0xff] %v34
    %147 = vst [vmem:[#allocation7 + $0x50] sm:$0xf] %v35
    %148 = vst [vmem:[#allocation7 + $0x58] sm:$0xf] %v36
    %149 = vst [vmem:[#allocation7 + $0x60] sm:$0xf] %v37
    %150 = vst [vmem:[#allocation7 + $0x68] sm:$0xf] %v38
    %151 = vst [vmem:[#allocation7 + $0x70] sm:$0xf] %v39
    %vm152 = vcmask 7168
    %153 = vst.msk [vmem:[%s2] sm:$0xff] %vm152, 0
    %154 = vst.msk [vmem:[%s2 + $0x8] sm:$0xff] %vm152, 0
    %155 = vst.msk [vmem:[%s2 + $0x10] sm:$0xff] %vm152, 0
    %156 = vst.msk [vmem:[%s2 + $0x18] sm:$0xff] %vm152, 0
    %s157 = scalar_lea.smem [#allocation3], 0
    %158 = sst [smem:[%s157]] inf
    loop: start=0, step=1, limit=200
    $region10: #{kmeans_unitspace_v2_forward.1} parent=1 // loop_pre_header
      _
    $region11: #{kmeans_unitspace_v2_forward.1} parent=1 // loop_header
      %s160 = sphi 0, %s164
      %p161 = scmp.ge.s32.totalorder %s160, 200
    $region12: #{kmeans_unitspace_v2_forward.1} parent=1 // loop_header_branch
      %163 = sbr.rel (%p161) target = $region16
    $region13: #{kmeans_unitspace_v2_forward.1} parent=1 // loop_body
      %s165 = sld [smem:[#allocation3]]
      %p166 = scmp.ge.f32.partialorder %s165, 1e-05
      // Predicated region
      $region17: #{kmeans_unitspace_v2_forward.1} parent=13 // pred_check
        %p167 = pneg %p166
      $region18: #{kmeans_unitspace_v2_forward.1} parent=13 // pred_check_branch
        %169 = sbr.rel (%p167) target = $region20
      $region19: #{kmeans_unitspace_v2_forward.1} parent=13 // pred_region
        %v170 = vld [vmem:[#allocation7] sm:$0xff]
        %v171 = vld [vmem:[#allocation7 + $0x8] sm:$0xff]
        %v172 = vld [vmem:[#allocation7 + $0x10] sm:$0xff]
        %v173 = vld [vmem:[#allocation7 + $0x18] sm:$0xff]
        %v174 = vld [vmem:[#allocation7 + $0x20] sm:$0xff]
        %v175 = vld [vmem:[#allocation7 + $0x28] sm:$0xff]
        %v176 = vld [vmem:[#allocation7 + $0x30] sm:$0xff]
        %v177 = vld [vmem:[#allocation7 + $0x38] sm:$0xff]
        %v178 = vld [vmem:[#allocation7 + $0x40] sm:$0xff]
        %v179 = vld [vmem:[#allocation7 + $0x48] sm:$0xff]
        %v180 = vld [vmem:[#allocation7 + $0x50] sm:$0xf]
        %v181 = vld [vmem:[#allocation7 + $0x58] sm:$0xf]
        %v182 = vld [vmem:[#allocation7 + $0x60] sm:$0xf]
        %v183 = vld [vmem:[#allocation7 + $0x68] sm:$0xf]
        %v184 = vld [vmem:[#allocation7 + $0x70] sm:$0xf]
        %v185 = vmul.f32 %v170, %v170
        %v186 = vmul.f32 %v171, %v171
        %v187 = vmul.f32 %v172, %v172
        %v188 = vmul.f32 %v173, %v173
        %v189 = vmul.f32 %v174, %v174
        %v190 = vmul.f32 %v175, %v175
        %v191 = vmul.f32 %v176, %v176
        %v192 = vmul.f32 %v177, %v177
        %v193 = vmul.f32 %v178, %v178
        %v194 = vmul.f32 %v179, %v179
        %v195 = vmul.f32 %v180, %v180
        %v196 = vmul.f32 %v181, %v181
        %v197 = vmul.f32 %v182, %v182
        %v198 = vmul.f32 %v183, %v183
        %v199 = vmul.f32 %v184, %v184
        %v200 = vadd.f32 %v185, %v186
        %v201 = vadd.f32 %v200, %v187
        %v202 = vadd.f32 %v201, %v188
        %v203 = vadd.f32 %v202, %v189
        %204 = vadd.xlane.f32.xlu0 %v203
        %v205 = vpop.xlane.xlu0 %204
        %v206 = vadd.f32 %v190, %v191
        %v207 = vadd.f32 %v206, %v192
        %v208 = vadd.f32 %v207, %v193
        %v209 = vadd.f32 %v208, %v194
        %210 = vadd.xlane.f32.xlu0 %v209
        %v211 = vpop.xlane.xlu0 %210
        %vm212 = vcmask 1043456
        %v213 = vsel %vm212, %v195, 0.0
        %v214 = vsel %vm212, %v196, 0.0
        %v215 = vadd.f32 %v213, %v214
        %v216 = vsel %vm212, %v197, 0.0
        %v217 = vadd.f32 %v215, %v216
        %v218 = vsel %vm212, %v198, 0.0
        %v219 = vadd.f32 %v217, %v218
        %v220 = vsel %vm212, %v199, 0.0
        %v221 = vadd.f32 %v219, %v220
        %222 = vadd.xlane.f32.xlu0 %v221
        %v223 = vpop.xlane.xlu0 %222
        %v224 = vmax.f32 %v205, 1e-24
        %v225 = vmax.f32 %v211, 1e-24
        %v226 = vmax.f32 %v223, 1e-24
        %v227 = vrsqrt.pop %v224
        %v228 = vrsqrt.pop %v225
        %v229 = vrsqrt.pop %v226
        %v230 = vmul.f32 %v170, %v227
        %v231 = vmul.f32 %v171, %v227
        %v232 = vmul.f32 %v172, %v227
        %v233 = vmul.f32 %v173, %v227
        %v234 = vmul.f32 %v174, %v227
        %v235 = vmul.f32 %v175, %v228
        %v236 = vmul.f32 %v176, %v228
        %v237 = vmul.f32 %v177, %v228
        %v238 = vmul.f32 %v178, %v228
        %v239 = vmul.f32 %v179, %v228
        %v240 = vmul.f32 %v180, %v229
        %v241 = vmul.f32 %v181, %v229
        %v242 = vmul.f32 %v182, %v229
        %v243 = vmul.f32 %v183, %v229
        %v244 = vmul.f32 %v184, %v229
        %v245 = vld [vmem:[#allocation2] sm:$0xff]
        %v246 = vld [vmem:[#allocation2 + $0x8] sm:$0xff]
        %v247 = vld [vmem:[#allocation2 + $0x10] sm:$0xff]
        %v248 = vld [vmem:[#allocation2 + $0x18] sm:$0xff]
        %v249 = vld [vmem:[#allocation2 + $0x20] sm:$0xff]
        %v250 = vld [vmem:[#allocation2 + $0x28] sm:$0xff]
        %v251 = vld [vmem:[#allocation2 + $0x30] sm:$0xff]
        %v252 = vld [vmem:[#allocation2 + $0x38] sm:$0xff]
        %v253 = vld [vmem:[#allocation2 + $0x40] sm:$0xff]
        %v254 = vld [vmem:[#allocation2 + $0x48] sm:$0xff]
        %v255 = vld [vmem:[#allocation2 + $0x50] sm:$0xff]
        %v256 = vld [vmem:[#allocation2 + $0x58] sm:$0xff]
        %v257 = vld [vmem:[#allocation2 + $0x60] sm:$0xff]
        %v258 = vld [vmem:[#allocation2 + $0x68] sm:$0xff]
        %v259 = vld [vmem:[#allocation2 + $0x70] sm:$0xff]
        %v260 = vld [vmem:[#allocation2 + $0x78] sm:$0xff]
        %v261 = vld [vmem:[#allocation2 + $0x80] sm:$0xff]
        %v262 = vld [vmem:[#allocation2 + $0x88] sm:$0xff]
        %v263 = vld [vmem:[#allocation2 + $0x90] sm:$0xff]
        %v264 = vld [vmem:[#allocation2 + $0x98] sm:$0xff]
        %265 = vmatprep.subr.mxu0 %v231
        %266 = vmatpush1.xpose.msra.mxu0 %v230
        %267 = vmatprep.subr.mxu0 %v236
        %268 = vmatpush1.xpose.msra.mxu0 %v235
        %269 = vmatprep.subr.mxu0 %v241
        %270 = vmatpush1.xpose.msra.mxu0 %v240
        %271 = vmatprep.subr.mxu0 0.0
        %272 = vmatpush1.xpose.msra.mxu0 0.0
        %273 = vmatprep.subr.mxu0 0.0
        %274 = vmatpush1.xpose.msra.mxu0 0.0
        %275 = vmatprep.subr.mxu0 0.0
        %276 = vmatpush1.xpose.msra.mxu0 0.0
        %277 = vmatprep.subr.mxu0 0.0
        %278 = vmatpush1.xpose.msra.mxu0 0.0
        %279 = vmatprep.subr.mxu0 0.0
        %280 = vmatpush1.xpose.msra.mxu0 0.0
        %281 = vmatprep.subr.mxu0 0.0
        %282 = vmatpush1.xpose.msra.mxu0 0.0
        %283 = vmatprep.subr.mxu0 0.0
        %284 = vmatpush1.xpose.msra.mxu0 0.0
        %285 = vmatprep.subr.mxu0 0.0
        %286 = vmatpush1.xpose.msra.mxu0 0.0
        %287 = vmatprep.subr.mxu0 0.0
        %288 = vmatpush1.xpose.msra.mxu0 0.0
        %289 = vmatprep.subr.mxu0 0.0
        %290 = vmatpush1.xpose.msra.mxu0 0.0
        %291 = vmatprep.subr.mxu0 0.0
        %292 = vmatpush1.xpose.msra.mxu0 0.0
        %293 = vmatprep.subr.mxu0 0.0
        %294 = vmatpush1.xpose.msra.mxu0 0.0
        %295 = vmatprep.subr.mxu0 0.0
        %296 = vmatpush1.xpose.msra.mxu0 0.0
        %297 = vmatprep.subr.mxu0 0.0
        %298 = vmatpush1.xpose.msra.mxu0 0.0
        %299 = vmatprep.subr.mxu0 0.0
        %300 = vmatpush1.xpose.msra.mxu0 0.0
        %301 = vmatprep.subr.mxu0 0.0
        %302 = vmatpush1.xpose.msra.mxu0 0.0
        %303 = vmatprep.subr.mxu0 0.0
        %304 = vmatpush1.xpose.msra.mxu0 0.0
        %305 = vmatprep.subr.mxu0 0.0
        %306 = vmatpush1.xpose.msra.mxu0 0.0
        %307 = vmatprep.subr.mxu0 0.0
        %308 = vmatpush1.xpose.msra.mxu0 0.0
        %309 = vmatprep.subr.mxu0 0.0
        %310 = vmatpush1.xpose.msra.mxu0 0.0
        %311 = vmatprep.subr.mxu0 0.0
        %312 = vmatpush1.xpose.msra.mxu0 0.0
        %313 = vmatprep.subr.mxu0 0.0
        %314 = vmatpush1.xpose.msra.mxu0 0.0
        %315 = vmatprep.subr.mxu0 0.0
        %316 = vmatpush1.xpose.msra.mxu0 0.0
        %317 = vmatprep.subr.mxu0 0.0
        %318 = vmatpush1.xpose.msra.mxu0 0.0
        %319 = vmatprep.subr.mxu0 0.0
        %320 = vmatpush1.xpose.msra.mxu0 0.0
        %321 = vmatprep.subr.mxu0 0.0
        %322 = vmatpush1.xpose.msra.mxu0 0.0
        %323 = vmatprep.subr.mxu0 0.0
        %324 = vmatpush1.xpose.msra.mxu0 0.0
        %325 = vmatprep.subr.mxu0 0.0
        %326 = vmatpush1.xpose.msra.mxu0 0.0
        %327 = vmatprep.subr.mxu0 0.0
        %328 = vmatpush1.xpose.msra.mxu0 0.0
        %329 = vmatprep.mubr.f32.mxu0 %v246
        %330 = vmatmul.mubr.f32.gmra.mrb[0].mxu0 %v245
        %v331 = vpop.f32.mrb[0].mxu0
        %v332 = vadd.f32 0.0, %v331
        %v333 = vpop.f32.mrb[0].mxu0
        %334 = vmatprep.mubr.f32.mxu0 %v251
        %335 = vmatmul.mubr.f32.gmra.mrb[0].mxu0 %v250
        %v336 = vpop.f32.mrb[0].mxu0
        %v337 = vadd.f32 0.0, %v336
        %v338 = vpop.f32.mrb[0].mxu0
        %339 = vmatprep.mubr.f32.mxu0 %v256
        %340 = vmatmul.mubr.f32.gmra.mrb[0].mxu0 %v255
        %v341 = vpop.f32.mrb[0].mxu0
        %v342 = vadd.f32 0.0, %v341
        %v343 = vpop.f32.mrb[0].mxu0
        %344 = vmatprep.mubr.f32.mxu0 %v261
        %345 = vmatmul.mubr.f32.gmra.mrb[0].mxu0 %v260
        %v346 = vpop.f32.mrb[0].mxu0
        %v347 = vadd.f32 0.0, %v346
        %v348 = vpop.f32.mrb[0].mxu0
        %349 = vdwg.mxu0
        %350 = vmatprep.subr.mxu0 %v233
        %351 = vmatpush1.xpose.msra.mxu0 %v232
        %352 = vmatprep.subr.mxu0 %v238
        %353 = vmatpush1.xpose.msra.mxu0 %v237
        %354 = vmatprep.subr.mxu0 %v243
        %355 = vmatpush1.xpose.msra.mxu0 %v242
        %356 = vmatprep.subr.mxu0 0.0
        %357 = vmatpush1.xpose.msra.mxu0 0.0
        %358 = vmatprep.subr.mxu0 0.0
        %359 = vmatpush1.xpose.msra.mxu0 0.0
        %360 = vmatprep.subr.mxu0 0.0
        %361 = vmatpush1.xpose.msra.mxu0 0.0
        %362 = vmatprep.subr.mxu0 0.0
        %363 = vmatpush1.xpose.msra.mxu0 0.0
        %364 = vmatprep.subr.mxu0 0.0
        %365 = vmatpush1.xpose.msra.mxu0 0.0
        %366 = vmatprep.subr.mxu0 0.0
        %367 = vmatpush1.xpose.msra.mxu0 0.0
        %368 = vmatprep.subr.mxu0 0.0
        %369 = vmatpush1.xpose.msra.mxu0 0.0
        %370 = vmatprep.subr.mxu0 0.0
        %371 = vmatpush1.xpose.msra.mxu0 0.0
        %372 = vmatprep.subr.mxu0 0.0
        %373 = vmatpush1.xpose.msra.mxu0 0.0
        %374 = vmatprep.subr.mxu0 0.0
        %375 = vmatpush1.xpose.msra.mxu0 0.0
        %376 = vmatprep.subr.mxu0 0.0
        %377 = vmatpush1.xpose.msra.mxu0 0.0
        %378 = vmatprep.subr.mxu0 0.0
        %379 = vmatpush1.xpose.msra.mxu0 0.0
        %380 = vmatprep.subr.mxu0 0.0
        %381 = vmatpush1.xpose.msra.mxu0 0.0
        %382 = vmatprep.subr.mxu0 0.0
        %383 = vmatpush1.xpose.msra.mxu0 0.0
        %384 = vmatprep.subr.mxu0 0.0
        %385 = vmatpush1.xpose.msra.mxu0 0.0
        %386 = vmatprep.subr.mxu0 0.0
        %387 = vmatpush1.xpose.msra.mxu0 0.0
        %388 = vmatprep.subr.mxu0 0.0
        %389 = vmatpush1.xpose.msra.mxu0 0.0
        %390 = vmatprep.subr.mxu0 0.0
        %391 = vmatpush1.xpose.msra.mxu0 0.0
        %392 = vmatprep.subr.mxu0 0.0
        %393 = vmatpush1.xpose.msra.mxu0 0.0
        %394 = vmatprep.subr.mxu0 0.0
        %395 = vmatpush1.xpose.msra.mxu0 0.0
        %396 = vmatprep.subr.mxu0 0.0
        %397 = vmatpush1.xpose.msra.mxu0 0.0
        %398 = vmatprep.subr.mxu0 0.0
        %399 = vmatpush1.xpose.msra.mxu0 0.0
        %400 = vmatprep.subr.mxu0 0.0
        %401 = vmatpush1.xpose.msra.mxu0 0.0
        %402 = vmatprep.subr.mxu0 0.0
        %403 = vmatpush1.xpose.msra.mxu0 0.0
        %404 = vmatprep.subr.mxu0 0.0
        %405 = vmatpush1.xpose.msra.mxu0 0.0
        %406 = vmatprep.subr.mxu0 0.0
        %407 = vmatpush1.xpose.msra.mxu0 0.0
        %408 = vmatprep.subr.mxu0 0.0
        %409 = vmatpush1.xpose.msra.mxu0 0.0
        %410 = vmatprep.subr.mxu0 0.0
        %411 = vmatpush1.xpose.msra.mxu0 0.0
        %412 = vmatprep.subr.mxu0 0.0
        %413 = vmatpush1.xpose.msra.mxu0 0.0
        %414 = vmatprep.mubr.f32.mxu0 %v248
        %415 = vmatmul.mubr.f32.gmra.mrb[0].mxu0 %v247
        %v416 = vpop.f32.mrb[0].mxu0
        %v417 = vadd.f32 %v332, %v416
        %v418 = vpop.f32.mrb[0].mxu0
        %419 = vmatprep.mubr.f32.mxu0 %v253
        %420 = vmatmul.mubr.f32.gmra.mrb[0].mxu0 %v252
        %v421 = vpop.f32.mrb[0].mxu0
        %v422 = vadd.f32 %v337, %v421
        %v423 = vpop.f32.mrb[0].mxu0
        %424 = vmatprep.mubr.f32.mxu0 %v258
        %425 = vmatmul.mubr.f32.gmra.mrb[0].mxu0 %v257
        %v426 = vpop.f32.mrb[0].mxu0
        %v427 = vadd.f32 %v342, %v426
        %v428 = vpop.f32.mrb[0].mxu0
        %429 = vmatprep.mubr.f32.mxu0 %v263
        %430 = vmatmul.mubr.f32.gmra.mrb[0].mxu0 %v262
        %v431 = vpop.f32.mrb[0].mxu0
        %v432 = vadd.f32 %v347, %v431
        %v433 = vpop.f32.mrb[0].mxu0
        %434 = vdwg.mxu0
        %435 = vmatprep.subr.mxu0 0.0
        %436 = vmatpush1.xpose.msra.mxu0 %v234
        %437 = vmatprep.subr.mxu0 0.0
        %438 = vmatpush1.xpose.msra.mxu0 %v239
        %439 = vmatprep.subr.mxu0 0.0
        %440 = vmatpush1.xpose.msra.mxu0 %v244
        %441 = vmatprep.subr.mxu0 0.0
        %442 = vmatpush1.xpose.msra.mxu0 0.0
        %443 = vmatprep.subr.mxu0 0.0
        %444 = vmatpush1.xpose.msra.mxu0 0.0
        %445 = vmatprep.subr.mxu0 0.0
        %446 = vmatpush1.xpose.msra.mxu0 0.0
        %447 = vmatprep.subr.mxu0 0.0
        %448 = vmatpush1.xpose.msra.mxu0 0.0
        %449 = vmatprep.subr.mxu0 0.0
        %450 = vmatpush1.xpose.msra.mxu0 0.0
        %451 = vmatprep.subr.mxu0 0.0
        %452 = vmatpush1.xpose.msra.mxu0 0.0
        %453 = vmatprep.subr.mxu0 0.0
        %454 = vmatpush1.xpose.msra.mxu0 0.0
        %455 = vmatprep.subr.mxu0 0.0
        %456 = vmatpush1.xpose.msra.mxu0 0.0
        %457 = vmatprep.subr.mxu0 0.0
        %458 = vmatpush1.xpose.msra.mxu0 0.0
        %459 = vmatprep.subr.mxu0 0.0
        %460 = vmatpush1.xpose.msra.mxu0 0.0
        %461 = vmatprep.subr.mxu0 0.0
        %462 = vmatpush1.xpose.msra.mxu0 0.0
        %463 = vmatprep.subr.mxu0 0.0
        %464 = vmatpush1.xpose.msra.mxu0 0.0
        %465 = vmatprep.subr.mxu0 0.0
        %466 = vmatpush1.xpose.msra.mxu0 0.0
        %467 = vmatprep.subr.mxu0 0.0
        %468 = vmatpush1.xpose.msra.mxu0 0.0
        %469 = vmatprep.subr.mxu0 0.0
        %470 = vmatpush1.xpose.msra.mxu0 0.0
        %471 = vmatprep.subr.mxu0 0.0
        %472 = vmatpush1.xpose.msra.mxu0 0.0
        %473 = vmatprep.subr.mxu0 0.0
        %474 = vmatpush1.xpose.msra.mxu0 0.0
        %475 = vmatprep.subr.mxu0 0.0
        %476 = vmatpush1.xpose.msra.mxu0 0.0
        %477 = vmatprep.subr.mxu0 0.0
        %478 = vmatpush1.xpose.msra.mxu0 0.0
        %479 = vmatprep.subr.mxu0 0.0
        %480 = vmatpush1.xpose.msra.mxu0 0.0
        %481 = vmatprep.subr.mxu0 0.0
        %482 = vmatpush1.xpose.msra.mxu0 0.0
        %483 = vmatprep.subr.mxu0 0.0
        %484 = vmatpush1.xpose.msra.mxu0 0.0
        %485 = vmatprep.subr.mxu0 0.0
        %486 = vmatpush1.xpose.msra.mxu0 0.0
        %487 = vmatprep.subr.mxu0 0.0
        %488 = vmatpush1.xpose.msra.mxu0 0.0
        %489 = vmatprep.subr.mxu0 0.0
        %490 = vmatpush1.xpose.msra.mxu0 0.0
        %491 = vmatprep.subr.mxu0 0.0
        %492 = vmatpush1.xpose.msra.mxu0 0.0
        %493 = vmatprep.subr.mxu0 0.0
        %494 = vmatpush1.xpose.msra.mxu0 0.0
        %495 = vmatprep.subr.mxu0 0.0
        %496 = vmatpush1.xpose.msra.mxu0 0.0
        %497 = vmatprep.subr.mxu0 0.0
        %498 = vmatpush1.xpose.msra.mxu0 0.0
        %499 = vmatprep.mubr.f32.mxu0 0.0
        %500 = vmatmul.mubr.f32.gmra.mrb[0].mxu0 %v249
        %v501 = vpop.f32.mrb[0].mxu0
        %v502 = vadd.f32 %v417, %v501
        %v503 = vpop.f32.mrb[0].mxu0
        %504 = vmatprep.mubr.f32.mxu0 0.0
        %505 = vmatmul.mubr.f32.gmra.mrb[0].mxu0 %v254
        %v506 = vpop.f32.mrb[0].mxu0
        %v507 = vadd.f32 %v422, %v506
        %v508 = vpop.f32.mrb[0].mxu0
        %509 = vmatprep.mubr.f32.mxu0 0.0
        %510 = vmatmul.mubr.f32.gmra.mrb[0].mxu0 %v259
        %v511 = vpop.f32.mrb[0].mxu0
        %v512 = vadd.f32 %v427, %v511
        %v513 = vpop.f32.mrb[0].mxu0
        %514 = vmatprep.mubr.f32.mxu0 0.0
        %515 = vmatmul.mubr.f32.gmra.mrb[0].mxu0 %v264
        %v516 = vpop.f32.mrb[0].mxu0
        %v517 = vadd.f32 %v432, %v516
        %v518 = vpop.f32.mrb[0].mxu0
        %519 = vdwg.mxu0
        %v520 = vlaneseq
        %v521 = vand.u32 %v520, 127
        %vm522 = vcmask 162816
        %v523 = vsel %vm522, %v502, -inf
        %524 = vmax.xlane.f32.xlu0 %v523
        %v525 = vpop.xlane.xlu0 %524
        %v526 = vsel %vm522, %v507, -inf
        %527 = vmax.xlane.f32.xlu0 %v526
        %v528 = vpop.xlane.xlu0 %527
        %v529 = vsel %vm522, %v512, -inf
        %530 = vmax.xlane.f32.xlu0 %v529
        %v531 = vpop.xlane.xlu0 %530
        %v532 = vsel %vm522, %v517, -inf
        %533 = vmax.xlane.f32.xlu0 %v532
        %v534 = vpop.xlane.xlu0 %533
        %vm535 = vcmp.eq.f32.partialorder %v502, %v525
        %vm536 = vcmp.eq.f32.partialorder %v507, %v528
        %vm537 = vcmp.eq.f32.partialorder %v512, %v531
        %vm538 = vcmp.eq.f32.partialorder %v517, %v534
        %v539 = vsel %vm535, %v521, 20
        %v540 = vsel %vm536, %v521, 20
        %v541 = vsel %vm537, %v521, 20
        %v542 = vsel %vm538, %v521, 20
        %v543 = vsel %vm522, %v539, 2147483647
        %v544 = vand.u32 %v543, 65535
        %v545 = vshra.s32 %v543, 16
        %v546 = vcvt.s32.f32 %v544
        %v547 = vcvt.s32.f32 %v545
        %548 = vmin.xlane.f32.xlu0 %v547
        %v549 = vpop.xlane.xlu0 %548
        %vm550 = vcmp.eq.f32.partialorder %v547, %v549
        %v551 = vsel %vm550, %v546, inf
        %552 = vmin.xlane.f32.xlu0 %v551
        %v553 = vpop.xlane.xlu0 %552
        %v554 = vcvt.f32.s32 %v553
        %v555 = vcvt.f32.s32 %v549
        %v556 = vshll.u32 %v555, 16
        %v557 = vadd.s32 %v556, %v554
        %v558 = vsel %vm522, %v540, 2147483647
        %v559 = vand.u32 %v558, 65535
        %v560 = vshra.s32 %v558, 16
        %v561 = vcvt.s32.f32 %v559
        %v562 = vcvt.s32.f32 %v560
        %563 = vmin.xlane.f32.xlu0 %v562
        %v564 = vpop.xlane.xlu0 %563
        %vm565 = vcmp.eq.f32.partialorder %v562, %v564
        %v566 = vsel %vm565, %v561, inf
        %567 = vmin.xlane.f32.xlu0 %v566
        %v568 = vpop.xlane.xlu0 %567
        %v569 = vcvt.f32.s32 %v568
        %v570 = vcvt.f32.s32 %v564
        %v571 = vshll.u32 %v570, 16
        %v572 = vadd.s32 %v571, %v569
        %v573 = vsel %vm522, %v541, 2147483647
        %v574 = vand.u32 %v573, 65535
        %v575 = vshra.s32 %v573, 16
        %v576 = vcvt.s32.f32 %v574
        %v577 = vcvt.s32.f32 %v575
        %578 = vmin.xlane.f32.xlu0 %v577
        %v579 = vpop.xlane.xlu0 %578
        %vm580 = vcmp.eq.f32.partialorder %v577, %v579
        %v581 = vsel %vm580, %v576, inf
        %582 = vmin.xlane.f32.xlu0 %v581
        %v583 = vpop.xlane.xlu0 %582
        %v584 = vcvt.f32.s32 %v583
        %v585 = vcvt.f32.s32 %v579
        %v586 = vshll.u32 %v585, 16
        %v587 = vadd.s32 %v586, %v584
        %v588 = vsel %vm522, %v542, 2147483647
        %v589 = vand.u32 %v588, 65535
        %v590 = vshra.s32 %v588, 16
        %v591 = vcvt.s32.f32 %v589
        %v592 = vcvt.s32.f32 %v590
        %593 = vmin.xlane.f32.xlu0 %v592
        %v594 = vpop.xlane.xlu0 %593
        %vm595 = vcmp.eq.f32.partialorder %v592, %v594
        %v596 = vsel %vm595, %v591, inf
        %597 = vmin.xlane.f32.xlu0 %v596
        %v598 = vpop.xlane.xlu0 %597
        %v599 = vcvt.f32.s32 %v598
        %v600 = vcvt.f32.s32 %v594
        %v601 = vshll.u32 %v600, 16
        %v602 = vadd.s32 %v601, %v599
        %vm603 = vcmp.eq.s32.totalorder %v521, %v557
        %vm604 = vcmp.eq.s32.totalorder %v521, %v572
        %vm605 = vcmp.eq.s32.totalorder %v521, %v587
        %vm606 = vcmp.eq.s32.totalorder %v521, %v602
        %v607 = vsel %vm603, 1, 0
        %v608 = vsel %vm604, 1, 0
        %v609 = vsel %vm605, 1, 0
        %v610 = vsel %vm606, 1, 0
        %v611 = vcvt.s32.f32 %v607
        %v612 = vcvt.s32.f32 %v608
        %v613 = vcvt.s32.f32 %v609
        %v614 = vcvt.s32.f32 %v610
        %v615 = vsel %vm522, %v611, 0.0
        %v616 = vsel %vm522, %v612, 0.0
        %v617 = vadd.f32 %v615, %v616
        %v618 = vsel %vm522, %v613, 0.0
        %v619 = vadd.f32 %v617, %v618
        %v620 = vsel %vm522, %v614, 0.0
        %v621 = vadd.f32 %v619, %v620
        %v622 = vrot.slane %v621, 4
        %v623 = vadd.f32 %v621, %v622
        %v624 = vrot.slane %v623, 2
        %v625 = vadd.f32 %v623, %v624
        %v626 = vrot.slane %v625, 1
        %v627 = vadd.f32 %v625, %v626
        %v628 = vadd.f32 %v627, 1e-06
        %v629 = vrcp.pop %v628
        %v630 = vmul.f32 %v611, %v629
        %v631 = vmul.f32 %v612, %v629
        %v632 = vmul.f32 %v613, %v629
        %v633 = vmul.f32 %v614, %v629
        %v634 = vld [vmem:[#allocation4] sm:$0xff]
        %v635 = vld [vmem:[#allocation4 + $0x8] sm:$0xff]
        %v636 = vld [vmem:[#allocation4 + $0x10] sm:$0xff]
        %v637 = vld [vmem:[#allocation4 + $0x18] sm:$0xff]
        %v638 = vld [vmem:[#allocation4 + $0x20] sm:$0xff]
        %v639 = vld [vmem:[#allocation4 + $0x28] sm:$0xff]
        %v640 = vld [vmem:[#allocation4 + $0x30] sm:$0xff]
        %v641 = vld [vmem:[#allocation4 + $0x38] sm:$0xff]
        %v642 = vld [vmem:[#allocation4 + $0x40] sm:$0xff]
        %v643 = vld [vmem:[#allocation4 + $0x48] sm:$0xff]
        %v644 = vld [vmem:[#allocation4 + $0x50] sm:$0xff]
        %v645 = vld [vmem:[#allocation4 + $0x58] sm:$0xff]
        %v646 = vld [vmem:[#allocation4 + $0x60] sm:$0xff]
        %v647 = vld [vmem:[#allocation4 + $0x68] sm:$0xff]
        %v648 = vld [vmem:[#allocation4 + $0x70] sm:$0xff]
        %v649 = vld [vmem:[#allocation4 + $0x78] sm:$0xff]
        %v650 = vld [vmem:[#allocation4 + $0x80] sm:$0xff]
        %v651 = vld [vmem:[#allocation4 + $0x88] sm:$0xff]
        %v652 = vld [vmem:[#allocation4 + $0x90] sm:$0xff]
        %v653 = vld [vmem:[#allocation4 + $0x98] sm:$0xff]
        %654 = vxpose.xlu0.b32.start [1/16] %v630, 128
        %655 = vxpose.xlu0.b32.cont [2/16] %v631, 128
        %656 = vxpose.xlu0.b32.cont [3/16] %v632, 128
        %657 = vxpose.xlu0.b32.cont [4/16] %v633, 128
        %658 = vxpose.xlu0.b32.cont [5/16] 0.0, 128
        %659 = vxpose.xlu0.b32.cont [6/16] 0.0, 128
        %660 = vxpose.xlu0.b32.cont [7/16] 0.0, 128
        %661 = vxpose.xlu0.b32.cont [8/16] 0.0, 128
        %662 = vxpose.xlu0.b32.cont [9/16] 0.0, 128
        %663 = vxpose.xlu0.b32.cont [10/16] 0.0, 128
        %664 = vxpose.xlu0.b32.cont [11/16] 0.0, 128
        %665 = vxpose.xlu0.b32.cont [12/16] 0.0, 128
        %666 = vxpose.xlu0.b32.cont [13/16] 0.0, 128
        %667 = vxpose.xlu0.b32.cont [14/16] 0.0, 128
        %668 = vxpose.xlu0.b32.cont [15/16] 0.0, 128
        %669 = vxpose.xlu0.b32.end [16/16] 0.0, 128
        %v670 = vpop.trf.xlu0
        %v671 = vpop.trf.xlu0
        %v672 = vpop.trf.xlu0
        %v673 = vpop.trf.xlu0
        %v674 = vpop.trf.xlu0
        %v675 = vpop.trf.xlu0
        %v676 = vpop.trf.xlu0
        %v677 = vpop.trf.xlu0
        %v678 = vpop.trf.xlu0
        %v679 = vpop.trf.xlu0
        %v680 = vpop.trf.xlu0
        %v681 = vpop.trf.xlu0
        %v682 = vpop.trf.xlu0
        %v683 = vpop.trf.xlu0
        %v684 = vpop.trf.xlu0
        %v685 = vpop.trf.xlu0
        %vm686 = vcmask 261120
        %v688 = vsel %vm686, %v670, 0
        %v691 = vsel %vm686, %v671, 0
        %v694 = vsel %vm686, %v672, 0
        %696 = vmatprep.subr.mxu0 %v635
        %697 = vmatpush1.msra.mxu0 %v634
        %698 = vmatprep.subr.mxu0 %v640
        %699 = vmatpush1.msra.mxu0 %v639
        %700 = vmatprep.subr.mxu0 %v645
        %701 = vmatpush1.msra.mxu0 %v644
        %702 = vmatprep.subr.mxu0 %v650
        %703 = vmatpush1.msra.mxu0 %v649
        %704 = vmatprep.subr.mxu0 0.0
        %705 = vmatpush1.msra.mxu0 0.0
        %706 = vmatprep.subr.mxu0 0.0
        %707 = vmatpush1.msra.mxu0 0.0
        %708 = vmatprep.subr.mxu0 0.0
        %709 = vmatpush1.msra.mxu0 0.0
        %710 = vmatprep.subr.mxu0 0.0
        %711 = vmatpush1.msra.mxu0 0.0
        %712 = vmatprep.subr.mxu0 0.0
        %713 = vmatpush1.msra.mxu0 0.0
        %714 = vmatprep.subr.mxu0 0.0
        %715 = vmatpush1.msra.mxu0 0.0
        %716 = vmatprep.subr.mxu0 0.0
        %717 = vmatpush1.msra.mxu0 0.0
        %718 = vmatprep.subr.mxu0 0.0
        %719 = vmatpush1.msra.mxu0 0.0
        %720 = vmatprep.subr.mxu0 0.0
        %721 = vmatpush1.msra.mxu0 0.0
        %722 = vmatprep.subr.mxu0 0.0
        %723 = vmatpush1.msra.mxu0 0.0
        %724 = vmatprep.subr.mxu0 0.0
        %725 = vmatpush1.msra.mxu0 0.0
        %726 = vmatprep.subr.mxu0 0.0
        %727 = vmatpush1.msra.mxu0 0.0
        %728 = vmatprep.subr.mxu0 0.0
        %729 = vmatpush1.msra.mxu0 0.0
        %730 = vmatprep.subr.mxu0 0.0
        %731 = vmatpush1.msra.mxu0 0.0
        %732 = vmatprep.subr.mxu0 0.0
        %733 = vmatpush1.msra.mxu0 0.0
        %734 = vmatprep.subr.mxu0 0.0
        %735 = vmatpush1.msra.mxu0 0.0
        %736 = vmatprep.subr.mxu0 0.0
        %737 = vmatpush1.msra.mxu0 0.0
        %738 = vmatprep.subr.mxu0 0.0
        %739 = vmatpush1.msra.mxu0 0.0
        %740 = vmatprep.subr.mxu0 0.0
        %741 = vmatpush1.msra.mxu0 0.0
        %742 = vmatprep.subr.mxu0 0.0
        %743 = vmatpush1.msra.mxu0 0.0
        %744 = vmatprep.subr.mxu0 0.0
        %745 = vmatpush1.msra.mxu0 0.0
        %746 = vmatprep.subr.mxu0 0.0
        %747 = vmatpush1.msra.mxu0 0.0
        %748 = vmatprep.subr.mxu0 0.0
        %749 = vmatpush1.msra.mxu0 0.0
        %750 = vmatprep.subr.mxu0 0.0
        %751 = vmatpush1.msra.mxu0 0.0
        %752 = vmatprep.subr.mxu0 0.0
        %753 = vmatpush1.msra.mxu0 0.0
        %754 = vmatprep.subr.mxu0 0.0
        %755 = vmatpush1.msra.mxu0 0.0
        %756 = vmatprep.subr.mxu0 0.0
        %757 = vmatpush1.msra.mxu0 0.0
        %758 = vmatprep.subr.mxu0 0.0
        %759 = vmatpush1.msra.mxu0 0.0
        %760 = vmatprep.mubr.f32.mxu0 0.0
        %761 = vmatmul.mubr.f32.gmra.mrb[0].mxu0 %v688
        %v762 = vpop.f32.mrb[0].mxu0
        %v763 = vadd.f32 0.0, %v762
        %v764 = vpop.f32.mrb[0].mxu0
        %v765 = vadd.f32 0.0, %v764
        %766 = vmatprep.mubr.f32.mxu0 0.0
        %767 = vmatmul.mubr.f32.gmra.mrb[0].mxu0 %v691
        %v768 = vpop.f32.mrb[0].mxu0
        %v769 = vadd.f32 0.0, %v768
        %v770 = vpop.f32.mrb[0].mxu0
        %v771 = vadd.f32 0.0, %v770
        %772 = vmatprep.mubr.f32.mxu0 0.0
        %773 = vmatmul.mubr.f32.gmra.mrb[0].mxu0 %v694
        %v774 = vpop.f32.mrb[0].mxu0
        %v775 = vadd.f32 0.0, %v774
        %v776 = vpop.f32.mrb[0].mxu0
        %v777 = vadd.f32 0.0, %v776
        %778 = vdwg.mxu0
        %779 = vmatprep.subr.mxu0 %v637
        %780 = vmatpush1.msra.mxu0 %v636
        %781 = vmatprep.subr.mxu0 %v642
        %782 = vmatpush1.msra.mxu0 %v641
        %783 = vmatprep.subr.mxu0 %v647
        %784 = vmatpush1.msra.mxu0 %v646
        %785 = vmatprep.subr.mxu0 %v652
        %786 = vmatpush1.msra.mxu0 %v651
        %787 = vmatprep.subr.mxu0 0.0
        %788 = vmatpush1.msra.mxu0 0.0
        %789 = vmatprep.subr.mxu0 0.0
        %790 = vmatpush1.msra.mxu0 0.0
        %791 = vmatprep.subr.mxu0 0.0
        %792 = vmatpush1.msra.mxu0 0.0
        %793 = vmatprep.subr.mxu0 0.0
        %794 = vmatpush1.msra.mxu0 0.0
        %795 = vmatprep.subr.mxu0 0.0
        %796 = vmatpush1.msra.mxu0 0.0
        %797 = vmatprep.subr.mxu0 0.0
        %798 = vmatpush1.msra.mxu0 0.0
        %799 = vmatprep.subr.mxu0 0.0
        %800 = vmatpush1.msra.mxu0 0.0
        %801 = vmatprep.subr.mxu0 0.0
        %802 = vmatpush1.msra.mxu0 0.0
        %803 = vmatprep.subr.mxu0 0.0
        %804 = vmatpush1.msra.mxu0 0.0
        %805 = vmatprep.subr.mxu0 0.0
        %806 = vmatpush1.msra.mxu0 0.0
        %807 = vmatprep.subr.mxu0 0.0
        %808 = vmatpush1.msra.mxu0 0.0
        %809 = vmatprep.subr.mxu0 0.0
        %810 = vmatpush1.msra.mxu0 0.0
        %811 = vmatprep.subr.mxu0 0.0
        %812 = vmatpush1.msra.mxu0 0.0
        %813 = vmatprep.subr.mxu0 0.0
        %814 = vmatpush1.msra.mxu0 0.0
        %815 = vmatprep.subr.mxu0 0.0
        %816 = vmatpush1.msra.mxu0 0.0
        %817 = vmatprep.subr.mxu0 0.0
        %818 = vmatpush1.msra.mxu0 0.0
        %819 = vmatprep.subr.mxu0 0.0
        %820 = vmatpush1.msra.mxu0 0.0
        %821 = vmatprep.subr.mxu0 0.0
        %822 = vmatpush1.msra.mxu0 0.0
        %823 = vmatprep.subr.mxu0 0.0
        %824 = vmatpush1.msra.mxu0 0.0
        %825 = vmatprep.subr.mxu0 0.0
        %826 = vmatpush1.msra.mxu0 0.0
        %827 = vmatprep.subr.mxu0 0.0
        %828 = vmatpush1.msra.mxu0 0.0
        %829 = vmatprep.subr.mxu0 0.0
        %830 = vmatpush1.msra.mxu0 0.0
        %831 = vmatprep.subr.mxu0 0.0
        %832 = vmatpush1.msra.mxu0 0.0
        %833 = vmatprep.subr.mxu0 0.0
        %834 = vmatpush1.msra.mxu0 0.0
        %835 = vmatprep.subr.mxu0 0.0
        %836 = vmatpush1.msra.mxu0 0.0
        %837 = vmatprep.subr.mxu0 0.0
        %838 = vmatpush1.msra.mxu0 0.0
        %839 = vmatprep.subr.mxu0 0.0
        %840 = vmatpush1.msra.mxu0 0.0
        %841 = vmatprep.subr.mxu0 0.0
        %842 = vmatpush1.msra.mxu0 0.0
        %843 = vmatprep.mubr.f32.mxu0 0.0
        %844 = vmatmul.mubr.f32.gmra.mrb[0].mxu0 %v688
        %v845 = vpop.f32.mrb[0].mxu0
        %v846 = vadd.f32 0.0, %v845
        %v847 = vpop.f32.mrb[0].mxu0
        %v848 = vadd.f32 0.0, %v847
        %849 = vmatprep.mubr.f32.mxu0 0.0
        %850 = vmatmul.mubr.f32.gmra.mrb[0].mxu0 %v691
        %v851 = vpop.f32.mrb[0].mxu0
        %v852 = vadd.f32 0.0, %v851
        %v853 = vpop.f32.mrb[0].mxu0
        %v854 = vadd.f32 0.0, %v853
        %855 = vmatprep.mubr.f32.mxu0 0.0
        %856 = vmatmul.mubr.f32.gmra.mrb[0].mxu0 %v694
        %v857 = vpop.f32.mrb[0].mxu0
        %v858 = vadd.f32 0.0, %v857
        %v859 = vpop.f32.mrb[0].mxu0
        %v860 = vadd.f32 0.0, %v859
        %861 = vdwg.mxu0
        %862 = vmatprep.subr.mxu0 0.0
        %863 = vmatpush1.msra.mxu0 %v638
        %864 = vmatprep.subr.mxu0 0.0
        %865 = vmatpush1.msra.mxu0 %v643
        %866 = vmatprep.subr.mxu0 0.0
        %867 = vmatpush1.msra.mxu0 %v648
        %868 = vmatprep.subr.mxu0 0.0
        %869 = vmatpush1.msra.mxu0 %v653
        %870 = vmatprep.subr.mxu0 0.0
        %871 = vmatpush1.msra.mxu0 0.0
        %872 = vmatprep.subr.mxu0 0.0
        %873 = vmatpush1.msra.mxu0 0.0
        %874 = vmatprep.subr.mxu0 0.0
        %875 = vmatpush1.msra.mxu0 0.0
        %876 = vmatprep.subr.mxu0 0.0
        %877 = vmatpush1.msra.mxu0 0.0
        %878 = vmatprep.subr.mxu0 0.0
        %879 = vmatpush1.msra.mxu0 0.0
        %880 = vmatprep.subr.mxu0 0.0
        %881 = vmatpush1.msra.mxu0 0.0
        %882 = vmatprep.subr.mxu0 0.0
        %883 = vmatpush1.msra.mxu0 0.0
        %884 = vmatprep.subr.mxu0 0.0
        %885 = vmatpush1.msra.mxu0 0.0
        %886 = vmatprep.subr.mxu0 0.0
        %887 = vmatpush1.msra.mxu0 0.0
        %888 = vmatprep.subr.mxu0 0.0
        %889 = vmatpush1.msra.mxu0 0.0
        %890 = vmatprep.subr.mxu0 0.0
        %891 = vmatpush1.msra.mxu0 0.0
        %892 = vmatprep.subr.mxu0 0.0
        %893 = vmatpush1.msra.mxu0 0.0
        %894 = vmatprep.subr.mxu0 0.0
        %895 = vmatpush1.msra.mxu0 0.0
        %896 = vmatprep.subr.mxu0 0.0
        %897 = vmatpush1.msra.mxu0 0.0
        %898 = vmatprep.subr.mxu0 0.0
        %899 = vmatpush1.msra.mxu0 0.0
        %900 = vmatprep.subr.mxu0 0.0
        %901 = vmatpush1.msra.mxu0 0.0
        %902 = vmatprep.subr.mxu0 0.0
        %903 = vmatpush1.msra.mxu0 0.0
        %904 = vmatprep.subr.mxu0 0.0
        %905 = vmatpush1.msra.mxu0 0.0
        %906 = vmatprep.subr.mxu0 0.0
        %907 = vmatpush1.msra.mxu0 0.0
        %908 = vmatprep.subr.mxu0 0.0
        %909 = vmatpush1.msra.mxu0 0.0
        %910 = vmatprep.subr.mxu0 0.0
        %911 = vmatpush1.msra.mxu0 0.0
        %912 = vmatprep.subr.mxu0 0.0
        %913 = vmatpush1.msra.mxu0 0.0
        %914 = vmatprep.subr.mxu0 0.0
        %915 = vmatpush1.msra.mxu0 0.0
        %916 = vmatprep.subr.mxu0 0.0
        %917 = vmatpush1.msra.mxu0 0.0
        %918 = vmatprep.subr.mxu0 0.0
        %919 = vmatpush1.msra.mxu0 0.0
        %920 = vmatprep.subr.mxu0 0.0
        %921 = vmatpush1.msra.mxu0 0.0
        %922 = vmatprep.subr.mxu0 0.0
        %923 = vmatpush1.msra.mxu0 0.0
        %924 = vmatprep.subr.mxu0 0.0
        %925 = vmatpush1.msra.mxu0 0.0
        %926 = vmatprep.mubr.f32.mxu0 0.0
        %927 = vmatmul.mubr.f32.gmra.mrb[0].mxu0 %v688
        %v928 = vpop.f32.mrb[0].mxu0
        %v929 = vadd.f32 0.0, %v928
        %v930 = vpop.f32.mrb[0].mxu0
        %931 = vmatprep.mubr.f32.mxu0 0.0
        %932 = vmatmul.mubr.f32.gmra.mrb[0].mxu0 %v691
        %v933 = vpop.f32.mrb[0].mxu0
        %v934 = vadd.f32 0.0, %v933
        %v935 = vpop.f32.mrb[0].mxu0
        %936 = vmatprep.mubr.f32.mxu0 0.0
        %937 = vmatmul.mubr.f32.gmra.mrb[0].mxu0 %v694
        %v938 = vpop.f32.mrb[0].mxu0
        %v939 = vadd.f32 0.0, %v938
        %v940 = vpop.f32.mrb[0].mxu0
        %941 = vdwg.mxu0
        %v942 = vsub.f32 %v763, %v170
        %v943 = vsub.f32 %v765, %v171
        %v944 = vsub.f32 %v846, %v172
        %v945 = vsub.f32 %v848, %v173
        %v946 = vsub.f32 %v929, %v174
        %v947 = vsub.f32 %v769, %v175
        %v948 = vsub.f32 %v771, %v176
        %v949 = vsub.f32 %v852, %v177
        %v950 = vsub.f32 %v854, %v178
        %v951 = vsub.f32 %v934, %v179
        %v952 = vsub.f32 %v775, %v180
        %v953 = vsub.f32 %v777, %v181
        %v954 = vsub.f32 %v858, %v182
        %v955 = vsub.f32 %v860, %v183
        %v956 = vsub.f32 %v939, %v184
        %v957 = vmul.f32 %v942, %v942
        %v958 = vmul.f32 %v943, %v943
        %v959 = vmul.f32 %v944, %v944
        %v960 = vmul.f32 %v945, %v945
        %v961 = vmul.f32 %v946, %v946
        %v962 = vmul.f32 %v947, %v947
        %v963 = vmul.f32 %v948, %v948
        %v964 = vmul.f32 %v949, %v949
        %v965 = vmul.f32 %v950, %v950
        %v966 = vmul.f32 %v951, %v951
        %v967 = vmul.f32 %v952, %v952
        %v968 = vmul.f32 %v953, %v953
        %v969 = vmul.f32 %v954, %v954
        %v970 = vmul.f32 %v955, %v955
        %v971 = vmul.f32 %v956, %v956
        %v972 = vadd.f32 %v957, %v958
        %v973 = vadd.f32 %v972, %v959
        %v974 = vadd.f32 %v973, %v960
        %v975 = vadd.f32 %v974, %v961
        %v976 = vadd.f32 %v975, %v962
        %v977 = vadd.f32 %v976, %v963
        %v978 = vadd.f32 %v977, %v964
        %v979 = vadd.f32 %v978, %v965
        %v980 = vadd.f32 %v979, %v966
        %v981 = vsel %vm212, %v967, 0.0
        %v982 = vadd.f32 %v980, %v981
        %v983 = vsel %vm212, %v968, 0.0
        %v984 = vadd.f32 %v982, %v983
        %v985 = vsel %vm212, %v969, 0.0
        %v986 = vadd.f32 %v984, %v985
        %v987 = vsel %vm212, %v970, 0.0
        %v988 = vadd.f32 %v986, %v987
        %v989 = vsel %vm212, %v971, 0.0
        %v990 = vadd.f32 %v988, %v989
        %991 = vadd.xlane.f32.xlu0 %v990
        %v992 = vpop.xlane.xlu0 %991
        %v993 = vrot.slane %v992, 4
        %v994 = vadd.f32 %v992, %v993
        %v995 = vrot.slane %v994, 2
        %v996 = vadd.f32 %v994, %v995
        %v997 = vrot.slane %v996, 1
        %v998 = vadd.f32 %v996, %v997
        %s999 = vtos %v998
        %s1000 = smul.f32 %s999, 7.8125e-05
        %1001 = sst [smem:[%s157]] %s1000
        %1002 = vst [vmem:[#allocation7] sm:$0xff] %v763
        %1003 = vst [vmem:[#allocation7 + $0x8] sm:$0xff] %v765
        %1004 = vst [vmem:[#allocation7 + $0x10] sm:$0xff] %v846
        %1005 = vst [vmem:[#allocation7 + $0x18] sm:$0xff] %v848
        %1006 = vst [vmem:[#allocation7 + $0x20] sm:$0xff] %v929
        %1007 = vst [vmem:[#allocation7 + $0x28] sm:$0xff] %v769
        %1008 = vst [vmem:[#allocation7 + $0x30] sm:$0xff] %v771
        %1009 = vst [vmem:[#allocation7 + $0x38] sm:$0xff] %v852
        %1010 = vst [vmem:[#allocation7 + $0x40] sm:$0xff] %v854
        %1011 = vst [vmem:[#allocation7 + $0x48] sm:$0xff] %v934
        %1012 = vst [vmem:[#allocation7 + $0x50] sm:$0xf] %v775
        %1013 = vst [vmem:[#allocation7 + $0x58] sm:$0xf] %v777
        %1014 = vst [vmem:[#allocation7 + $0x60] sm:$0xf] %v858
        %1015 = vst [vmem:[#allocation7 + $0x68] sm:$0xf] %v860
        %1016 = vst [vmem:[#allocation7 + $0x70] sm:$0xf] %v939
        %1017 = vst.msk [vmem:[%s2] sm:$0xff] %vm152, %v557
        %1018 = vst.msk [vmem:[%s2 + $0x8] sm:$0xff] %vm152, %v572
        %1019 = vst.msk [vmem:[%s2 + $0x10] sm:$0xff] %vm152, %v587
        %1020 = vst.msk [vmem:[%s2 + $0x18] sm:$0xff] %vm152, %v602
      $region20: #{kmeans_unitspace_v2_forward.1} parent=13 // pred_fallthru
        _
    $region14: #{kmeans_unitspace_v2_forward.1} parent=1 // loop_footer
      %s164 = sadd.s32 1, %s160
    $region15: #{kmeans_unitspace_v2_forward.1} parent=1 // loop_footer_branch
      %159 = sbr.rel target = $region11
    $region16: #{kmeans_unitspace_v2_forward.1} parent=1 // loop_exit
      _
    // Predicated region
    $region21: #{kmeans_unitspace_v2_forward.1} parent=1 // pred_check
      _
    $region22: #{kmeans_unitspace_v2_forward.1} parent=1 // pred_check_branch
      %1022 = sbr.rel (0) target = $region24
    $region23: #{kmeans_unitspace_v2_forward.1} parent=1 // pred_region
      %s1024 = ssub.s32 1920, 1920
      %1025 = vsyncadd [#allocation6], %s1024
      %s1026 = sshll.u32 [#allocation7], 4
      %s1027 = int_to_ptr.vmem [resolvable:$true] %s1026
      %1032 = dma.vmem_to_hbm [thread:$0]  %s1027, 1920, %s1, [#allocation6], 640, 640, 40
    $region24: #{kmeans_unitspace_v2_forward.1} parent=1 // pred_fallthru
      _
    // Predicated region
    $region25: #{kmeans_unitspace_v2_forward.1} parent=1 // pred_check
      _
    $region26: #{kmeans_unitspace_v2_forward.1} parent=1 // pred_check_branch
      %1034 = sbr.rel (0) target = $region28
    $region27: #{kmeans_unitspace_v2_forward.1} parent=1 // pred_region
      _
    $region28: #{kmeans_unitspace_v2_forward.1} parent=1 // pred_fallthru
      _
    // Predicated region
    $region29: #{kmeans_unitspace_v2_forward.1} parent=1 // pred_check
      _
    $region30: #{kmeans_unitspace_v2_forward.1} parent=1 // pred_check_branch
      %1036 = sbr.rel (0) target = $region32
    $region31: #{kmeans_unitspace_v2_forward.1} parent=1 // pred_region
      %1037 = dma.done [#allocation6], 1920
    $region32: #{kmeans_unitspace_v2_forward.1} parent=1 // pred_fallthru
      _
    // Predicated region
    $region33: #{kmeans_unitspace_v2_forward.1} parent=1 // pred_check
      _
    $region34: #{kmeans_unitspace_v2_forward.1} parent=1 // pred_check_branch
      %1039 = sbr.rel (0) target = $region36
    $region35: #{kmeans_unitspace_v2_forward.1} parent=1 // pred_region
      _
    $region36: #{kmeans_unitspace_v2_forward.1} parent=1 // pred_fallthru
      _
    %1040 = vsyncpa [#allocation5], 1
    %1041 = vsyncpa [#allocation6], 1

</llo_original>
